<compile_context>
chip_gen: v7x
topology: tpu7x:2x2x1
jax: 0.10.0
libtpu: 0.0.40
codegen_flags: <defaults>
</compile_context>

<pallas_src>
import functools

import jax
import jax.numpy as jnp
from jax.experimental import pallas as pl
from jax.experimental.pallas import tpu as pltpu


def _conv1d_kernel(x_ref, w_ref, b_ref, o_ref, *, kernel_size, stride, reflect,
                   compute_dtype):
    """One batch block of ConvLayer2.

    x_ref: (NB, Cin, L)       native dtype (cast to compute_dtype in-kernel)
    w_ref: (Cout, K*Cin)      compute dtype, rows tap-major (k*Cin + c)
    b_ref: (Cout, 1)          f32
    o_ref: (Cout, NB*Lout)    output dtype, columns batch-major (i*Lout + l)
    """
    nb = x_ref.shape[0]
    lout = o_ref.shape[-1] // nb

    # In-kernel cast: x is DMA'd in its native dtype and narrowed here, so the
    # wrapper never makes a separate (un-hidden) cast pass over x in HBM.
    x = x_ref[...].astype(compute_dtype)                    # (NB, Cin, L)

    if reflect > 0:
        # Fused ReflectionPad1d: mirror `reflect` columns on each side in VMEM
        # instead of materializing a padded copy of x in HBM.
        p = reflect
        left = x[:, :, 1:p + 1][:, :, ::-1]
        right = x[:, :, -1 - p:-1][:, :, ::-1]
        x = jnp.concatenate([left, x, right], axis=-1)      # (NB, Cin, L + 2p)
    lpad = x.shape[-1]

    # Tap extraction.  The K taps are stacked along the contraction axis so the
    # conv becomes ONE deep (K*Cin) contraction instead of K shallow ones.
    if stride == 1:
        taps = [x[:, :, k:k + lout] for k in range(kernel_size)]
    else:
        # Deinterleave once into `stride` phase planes; every tap is then a
        # contiguous lane slice of a phase (cheaper than K strided slices).
        nphase = min(stride, kernel_size)
        phases = [jax.lax.slice_in_dim(x, s, lpad, stride, axis=2)
                  for s in range(nphase)]
        taps = [phases[k % stride][:, :, (k // stride):(k // stride) + lout]
                for k in range(kernel_size)]
    xs3 = jnp.concatenate(taps, axis=1)                      # (NB, K*Cin, Lout)

    # Fold the batch block into the lane / MXU-N dimension: RHS (K*Cin, NB*Lout).
    # NB leading-axis slices + one concat (avoids a 3-D transpose relayout).
    xs2 = jnp.concatenate([xs3[i] for i in range(nb)], axis=1)

    # Single MXU matmul for the whole block, f32 accumulation, bias folded in.
    w = w_ref[...]                                           # (Cout, K*Cin)
    b = b_ref[...]                                           # (Cout, 1) f32
    acc = jnp.dot(w, xs2, preferred_element_type=jnp.float32) + b
    # Lane-dense store: one (Cout, NB*Lout) slab per grid step.
    o_ref[...] = acc.astype(o_ref.dtype)


def conv_layer2(x, weight, bias, *, kernel_size, stride=1, groups=1, pad=False,
                compute_dtype=jnp.bfloat16, batch_block=8):
    """Forward pass of ConvLayer2: (optional ReflectionPad1d(K//2)) -> Conv1d.

    x:      (N, Cin, L)       weight: (Cout, Cin, K)  (PyTorch layout)
    bias:   (Cout,)
    `pad`, `kernel_size`, `stride`, `groups` must be static Python values.
    Note: the default bf16 compute accumulates in f32 on the MXU; for very
    large K*Cin pass compute_dtype=jnp.float32 to track a PyTorch f32 Conv1d
    more closely.
    """
    if groups != 1:
        # TODO(synk): grouped conv (groups > 1) is not implemented in the kernel.
        raise NotImplementedError("groups > 1 not supported")

    n, cin, l = x.shape
    cout, cin_w, k = weight.shape
    assert cin_w == cin and k == kernel_size

    p = kernel_size // 2 if pad else 0
    if pad and l <= p:
        raise ValueError(f"ReflectionPad1d requires length > padding ({l} <= {p})")
    lpad = l + 2 * p
    lout = (lpad - kernel_size) // stride + 1
    if lout <= 0:
        raise ValueError("output length would be <= 0")

    out_dtype = x.dtype
    cb = jnp.dtype(compute_dtype).itemsize
    xb = jnp.dtype(x.dtype).itemsize
    ob = jnp.dtype(out_dtype).itemsize

    # --- batch-block (grid-step) sizing --------------------------------------
    # Per-batch-element VMEM footprint: double-buffered input/output blocks plus
    # the in-kernel intermediates (cast copy, padded copy / phases, tap stack,
    # f32 accumulator).  Sized against a conservative budget so the same code
    # keeps 2-deep pipelining inside v7x's smaller (64 MiB) VMEM.
    per_elem = (2 * cin * l * xb                      # input block, 2x buffered
                + cin * l * cb                        # compute-dtype copy of x
                + 2 * cin * lpad * cb                 # padded copy + phase planes
                + 2 * kernel_size * cin * lout * cb   # tap stack + 2-D RHS
                + cout * lout * 4                     # f32 accumulator
                + 2 * cout * lout * ob)               # output block, 2x buffered
    fixed = 2 * (cout * kernel_size * cin * cb + cout * 4)   # weights + bias
    vmem_budget = 24 * 1024 * 1024

    if n <= 1:
        nb = 1
    else:
        # Keep >= 2 grid steps so both of v7x's TensorCores get work.
        nb = max(1, min(batch_block, n // 2))
        while nb > 1 and nb * per_elem + fixed > vmem_budget:
            nb //= 2
    # Awkward N (e.g. prime): pad the batch up to a multiple of nb instead of
    # degrading to nb=1 (per-step pipeline overhead dominates tiny blocks).
    n_pad = ((n + nb - 1) // nb) * nb
    x_in = jnp.pad(x, ((0, n_pad - n), (0, 0), (0, 0))) if n_pad != n else x
    grid_b = n_pad // nb

    # --- small operands (cast in the wrapper, negligible traffic) ------------
    # (Cout, Cin, K) -> (Cout, K, Cin) -> (Cout, K*Cin): tap-major rows matching
    # the tap-stacking order inside the kernel.
    w_flat = jnp.transpose(weight, (0, 2, 1)).reshape(cout, kernel_size * cin)
    w_flat = w_flat.astype(compute_dtype)
    b2 = bias.reshape(cout, 1).astype(jnp.float32)

    kernel = functools.partial(
        _conv1d_kernel, kernel_size=kernel_size, stride=stride, reflect=p,
        compute_dtype=compute_dtype)

    vmem_limit = int(min(64 * 1024 * 1024,
                         max(32 * 1024 * 1024, 2 * (nb * per_elem + fixed))))

    cost = pl.CostEstimate(
        flops=2 * n * cout * kernel_size * cin * lout,
        transcendentals=0,
        bytes_accessed=(n * cin * l * xb
                        + cout * kernel_size * cin * cb + cout * 4
                        + n * cout * lout * ob))

    # TODO(synk): for very long L, add a length grid axis with a (K-1)-halo
    # (pl.Element offsets / manual DMA) and 256-multiple (v6e/v7x) or
    # 128-multiple (v5e) Lout tiles; whole-L blocks are fine at ASR-like sizes.
    # TODO(synk): weights/bias keep the default 2-deep pipeline buffers; their
    # footprint here is negligible (pin with pipeline_mode=pl.Buffered(1) when
    # Cout*K*Cin becomes large).
    out3 = pl.pallas_call(
        kernel,
        out_shape=jax.ShapeDtypeStruct((grid_b, cout, nb * lout), out_dtype),
        grid_spec=pltpu.PrefetchScalarGridSpec(
            num_scalar_prefetch=0,
            grid=(grid_b,),
            in_specs=[
                pl.BlockSpec((nb, cin, l), lambda b: (b, 0, 0)),
                # Constant block indices -> weights/bias stay VMEM resident and
                # are not re-DMA'd across batch steps.
                pl.BlockSpec((cout, kernel_size * cin), lambda b: (0, 0)),
                pl.BlockSpec((cout, 1), lambda b: (0, 0)),
            ],
            out_specs=pl.BlockSpec((None, cout, nb * lout), lambda b: (b, 0, 0)),
        ),
        compiler_params=pltpu.CompilerParams(
            dimension_semantics=("parallel",),
            vmem_limit_bytes=vmem_limit),
        cost_estimate=cost,
    )(x_in, w_flat, b2)

    # Un-flatten the lane-dense (Cout, NB*Lout) slabs back to (N, Cout, Lout)
    # (layout plumbing outside the kernel; columns are batch-major).
    out = out3.reshape(grid_b, cout, nb, lout).transpose(0, 2, 1, 3)
    out = out.reshape(n_pad, cout, lout)
    return out[:n] if n_pad != n else out


def _reference(x, weight, bias, *, kernel_size, stride=1, pad=False,
               compute_dtype=jnp.bfloat16):
    out_dtype = x.dtype
    if pad:
        p = kernel_size // 2
        x = jnp.pad(x, ((0, 0), (0, 0), (p, p)), mode="reflect")
    y = jax.lax.conv_general_dilated(
        x.astype(compute_dtype), weight.astype(compute_dtype),
        window_strides=(stride,), padding="VALID",
        dimension_numbers=("NCH", "OIH", "NCH"),
        preferred_element_type=jnp.float32)
    return (y + bias.astype(jnp.float32)[None, :, None]).astype(out_dtype)


@functools.partial(jax.jit,
                   static_argnames=("kernel_size", "stride", "pad", "compute_dtype"))
def _fwd(x, weight, bias, *, kernel_size, stride, pad,
         compute_dtype=jnp.bfloat16):
    return conv_layer2(x, weight, bias, kernel_size=kernel_size, stride=stride,
                       pad=pad, compute_dtype=compute_dtype)


def _check(x, weight, bias, *, kernel_size, stride, pad, compute_dtype, tol):
    out = jax.block_until_ready(
        _fwd(x, weight, bias, kernel_size=kernel_size, stride=stride, pad=pad,
             compute_dtype=compute_dtype))
    ref = _reference(x, weight, bias, kernel_size=kernel_size, stride=stride,
                     pad=pad, compute_dtype=compute_dtype)
    assert out.shape == ref.shape, (out.shape, ref.shape)
    err = float(jnp.max(jnp.abs(out - ref)))
    assert jnp.allclose(out, ref, atol=tol, rtol=tol), err
    return out


if __name__ == "__main__":
    # Small shapes consistent with the module: batch=2, in_channels=4,
    # out_channels=8, length=16, kernel_size=3.
    N, C_IN, C_OUT, L, K = 2, 4, 8, 16, 3

    key = jax.random.PRNGKey(0)
    kx, kw, kb = jax.random.split(key, 3)
    x = jax.random.normal(kx, (N, C_IN, L), dtype=jnp.float32)
    bound = 1.0 / (C_IN * K) ** 0.5
    weight = jax.random.uniform(kw, (C_OUT, C_IN, K), jnp.float32, -bound, bound)
    bias = jax.random.uniform(kb, (C_OUT,), jnp.float32, -bound, bound)

    # pad=False, stride=1: valid conv, output length L - K + 1.
    out = _check(x, weight, bias, kernel_size=K, stride=1, pad=False,
                 compute_dtype=jnp.bfloat16, tol=1e-4)
    assert out.shape == (N, C_OUT, L - K + 1)

    # pad=True, stride=1: reflection pad -> output length L.
    out = _check(x, weight, bias, kernel_size=K, stride=1, pad=True,
                 compute_dtype=jnp.bfloat16, tol=1e-4)
    assert out.shape == (N, C_OUT, L)

    # pad=True, stride=2: strided output columns computed via phase planes.
    out = _check(x, weight, bias, kernel_size=K, stride=2, pad=True,
                 compute_dtype=jnp.bfloat16, tol=1e-4)
    assert out.shape == (N, C_OUT, (L + 2 * (K // 2) - K) // 2 + 1)

    # f32 compute path (tighter tolerance; documents the bf16 accuracy caveat).
    out = _check(x, weight, bias, kernel_size=K, stride=1, pad=True,
                 compute_dtype=jnp.float32, tol=1e-5)
    assert out.shape == (N, C_OUT, L)

    # Awkward batch (N=5): the batch is padded up to a multiple of the block
    # (nb=2 -> n_pad=6) instead of degrading to 1 element per grid step.
    x5 = jax.random.normal(kx, (5, C_IN, L), dtype=jnp.float32)
    out = _check(x5, weight, bias, kernel_size=K, stride=1, pad=True,
                 compute_dtype=jnp.bfloat16, tol=1e-4)
    assert out.shape == (5, C_OUT, L)

    print("KERNEL_OK")
</pallas_src>

<mosaic_0001>
module attributes {stable_mosaic.version = 11 : i64} {
  func.func @_conv1d_kernel(%arg0: i32, %arg1: memref<1x4x16xf32, #tpu.memory_space<vmem>>, %arg2: memref<8x12xbf16, #tpu.memory_space<vmem>>, %arg3: memref<8x1xf32, #tpu.memory_space<vmem>>, %arg4: memref<1x8x14xf32, #tpu.memory_space<vmem>>) attributes {dimension_semantics = [#tpu.dimension_semantics<parallel>], iteration_bounds = array<i64: 2>, scalar_prefetch = 0 : i64, scratch_operands = 0 : i64, tpu.core_type = #tpu.core_type<tc>, window_params = [{transform_indices = @transform_0, window_bounds = array<i64: 1, 4, 16>}, {pipeline_mode = #tpu.pipeline_mode<synchronous>, transform_indices = @transform_1, window_bounds = array<i64: 8, 12>}, {pipeline_mode = #tpu.pipeline_mode<synchronous>, transform_indices = @transform_2, window_bounds = array<i64: 8, 1>}, {transform_indices = @transform_3, window_bounds = array<i64: 1, 8, 14>}]} {
    %c0 = arith.constant 0 : index
    %c0_0 = arith.constant 0 : index
    %c0_1 = arith.constant 0 : index
    %0 = vector.load %arg1[%c0, %c0_0, %c0_1] : memref<1x4x16xf32, #tpu.memory_space<vmem>>, vector<1x4x16xf32>
    %1 = arith.truncf %0 : vector<1x4x16xf32> to vector<1x4x16xbf16>
    %2 = vector.extract_strided_slice %1 {offsets = [0, 0, 0], sizes = [1, 4, 14], strides = [1, 1, 1]} : vector<1x4x16xbf16> to vector<1x4x14xbf16>
    %3 = vector.extract_strided_slice %1 {offsets = [0, 0, 1], sizes = [1, 4, 14], strides = [1, 1, 1]} : vector<1x4x16xbf16> to vector<1x4x14xbf16>
    %4 = vector.extract_strided_slice %1 {offsets = [0, 0, 2], sizes = [1, 4, 14], strides = [1, 1, 1]} : vector<1x4x16xbf16> to vector<1x4x14xbf16>
    %5 = tpu.concatenate %2, %3, %4 in 1 : vector<1x4x14xbf16>, vector<1x4x14xbf16>, vector<1x4x14xbf16> -> vector<1x12x14xbf16>
    %6 = vector.shape_cast %5 : vector<1x12x14xbf16> to vector<12x14xbf16>
    %c0_2 = arith.constant 0 : index
    %c0_3 = arith.constant 0 : index
    %7 = vector.load %arg2[%c0_2, %c0_3] : memref<8x12xbf16, #tpu.memory_space<vmem>>, vector<8x12xbf16>
    %c0_4 = arith.constant 0 : index
    %c0_5 = arith.constant 0 : index
    %8 = vector.load %arg3[%c0_4, %c0_5] : memref<8x1xf32, #tpu.memory_space<vmem>>, vector<8x1xf32>
    %cst = arith.constant dense<0.000000e+00> : vector<8x14xf32>
    %9 = tpu.matmul %7, %6, %cst {dimension_numbers = #tpu.dot_dimension_numbers<[1], [0], [0], [1], [0, 0, 1, 1], [], []>} : vector<8x12xbf16>, vector<12x14xbf16>, vector<8x14xf32> -> vector<8x14xf32>
    %10 = vector.broadcast %8 : vector<8x1xf32> to vector<8x14xf32>
    %11 = arith.addf %9, %10 : vector<8x14xf32>
    %c0_6 = arith.constant 0 : index
    %c0_7 = arith.constant 0 : index
    %c0_8 = arith.constant 0 : index
    %12 = vector.load %arg4[%c0_6, %c0_7, %c0_8] : memref<1x8x14xf32, #tpu.memory_space<vmem>>, vector<1x8x14xf32>
    %13 = vector.shape_cast %12 : vector<1x8x14xf32> to vector<8x14xf32>
    %14 = vector.shape_cast %11 : vector<8x14xf32> to vector<1x8x14xf32>
    tpu.vector_store %arg4[%c0_6, %c0_7, %c0_8], %14 {strides = array<i32>} : memref<1x8x14xf32, #tpu.memory_space<vmem>>, vector<1x8x14xf32>,
    return
  }
  func.func @transform_0(%arg0: i32) -> (i32, i32, i32) {
    %c0_i32 = arith.constant 0 : i32
    %c0_i32_0 = arith.constant 0 : i32
    %c0_i32_1 = arith.constant 0 : i32
    return %arg0, %c0_i32, %c0_i32_0 : i32, i32, i32
  }
  func.func @transform_1(%arg0: i32) -> (i32, i32) {
    %c0_i32 = arith.constant 0 : i32
    %c0_i32_0 = arith.constant 0 : i32
    %c0_i32_1 = arith.constant 0 : i32
    return %c0_i32, %c0_i32_0 : i32, i32
  }
  func.func @transform_2(%arg0: i32) -> (i32, i32) {
    %c0_i32 = arith.constant 0 : i32
    %c0_i32_0 = arith.constant 0 : i32
    %c0_i32_1 = arith.constant 0 : i32
    return %c0_i32, %c0_i32_0 : i32, i32
  }
  func.func @transform_3(%arg0: i32) -> (i32, i32, i32) {
    %c0_i32 = arith.constant 0 : i32
    %c0_i32_0 = arith.constant 0 : i32
    %c0_i32_1 = arith.constant 0 : i32
    return %arg0, %c0_i32, %c0_i32_0 : i32, i32, i32
  }
}

</mosaic_0001>

<llo_original>
// kernel: _fwd.1
$region0: #{_fwd.1}
  #allocation0 [shape = 'u32[]', space=smem, size = 0x4, offset = 0x4, fixed_abs, tag = 'smem constant byte address 0x4 - core index']
  #allocation1 [shape = 'u32[144,128]{1,0:T(1,128)}', space=vmem, size = 0x12000, scoped, tag = 'internal scratch']
  %s0 = inlined_call_operand.vmem [shape: f32[2,4,16], index: 0, kind: input, shape index: {}]
  %s1 = inlined_call_operand.vmem [shape: bf16[8,12], index: 1, kind: input, shape index: {}]
  %s2 = inlined_call_operand.vmem [shape: f32[8,1], index: 2, kind: input, shape index: {}]
  %s3 = inlined_call_operand.hbm [shape: f32[2,8,14], index: 3, kind: output, shape index: {}]
  %s4 = sld [smem:[#allocation0]]
  $region45: #{_fwd.1} parent=0
    _
  %s6 = ssub.s32 1, %s4
  %s7 = scalar_select 0, %s6, %s4
  $region1: #{_fwd.1} parent=0
    #allocation2 [shape = 'u8[8192]{0}', space=vmem, size = 0x2000, scoped, tag = 'output window, operand 0']
    #allocation3 [shape = 's32[2]{0}', space=sflag, size = 0x8, scoped, tag = 'scoped memory for _fwd.1']
    %8 = vsyncpa [#allocation3], 0
    %s9 = scalar_lea.sflag [#allocation3], 1
    %10 = vsyncpa %s9, 0
    loop: start=0, step=1, limit=4
    $region2: #{_fwd.1} parent=1 // loop_pre_header
      _
    $region3: #{_fwd.1} parent=1 // loop_header
      %s12 = sphi 0, %s16
      %p13 = scmp.ge.s32.totalorder %s12, 4
      %s22 = sphi 0, %s24
      %s25 = sphi 0, %s22
      %s26 = sphi 0, %s25
      %s42 = sphi 0, %s26
      %s46 = sphi 0, %s46
      %s48 = sphi 0, %s46
      %s49 = sphi 0, %s48
      %s63 = sphi 0, %s49
      %s67 = sphi 0, %s67
      %s69 = sphi 0, %s67
      %s70 = sphi 0, %s69
      %s84 = sphi 0, %s70
      %s90 = sphi 0, %s92
      %s93 = sphi 0, %s90
      %s94 = sphi 0, %s93
      %s110 = sphi 0, %s94
    $region4: #{_fwd.1} parent=1 // loop_header_branch
      %15 = sbr.rel (%p13) target = $region8
    $region5: #{_fwd.1} parent=1 // loop_body
      %s17 = ssub.s32 %s12, 1
      %s18 = ssub.s32 %s12, 2
      %s19 = sadd.s32 %s12, 1
      %s20 = ssub.s32 %s12, %s19
      %p21 = scmp.eq.s32.totalorder %s20, 0
      %s23 = sadd.s32 %s22, 1
      %s24 = scalar_select %p21, %s22, %s23
      %p27 = pneg %p21
      %p28 = scmp.eq.s32.totalorder %s12, 1
      %p29 = por %p27, %p28
      %p30 = scmp.ne.s32.totalorder %s22, %s25
      %p31 = scmp.eq.s32.totalorder %s12, 0
      %p32 = por %p30, %p31
      %p33 = scmp.ne.s32.totalorder %s22, %s25
      %p34 = scmp.eq.s32.totalorder %s17, 1
      %p35 = por %p33, %p34
      %p36 = scmp.ne.s32.totalorder %s25, %s26
      %p37 = scmp.eq.s32.totalorder %s17, 0
      %p38 = por %p36, %p37
      %p39 = scmp.ne.s32.totalorder %s25, %s26
      %p40 = scmp.eq.s32.totalorder %s18, 1
      %p41 = por %p39, %p40
      %p43 = scmp.ne.s32.totalorder %s26, %s42
      %p44 = scmp.eq.s32.totalorder %s18, 0
      %p45 = por %p43, %p44
      %s47 = sadd.s32 %s46, 1
      %p50 = scmp.eq.s32.totalorder %s12, 1
      %p51 = scmp.ne.s32.totalorder %s46, %s48
      %p52 = scmp.eq.s32.totalorder %s12, 0
      %p53 = por %p51, %p52
      %p54 = scmp.ne.s32.totalorder %s46, %s48
      %p55 = scmp.eq.s32.totalorder %s17, 1
      %p56 = por %p54, %p55
      %p57 = scmp.ne.s32.totalorder %s48, %s49
      %p58 = scmp.eq.s32.totalorder %s17, 0
      %p59 = por %p57, %p58
      %p60 = scmp.ne.s32.totalorder %s48, %s49
      %p61 = scmp.eq.s32.totalorder %s18, 1
      %p62 = por %p60, %p61
      %p64 = scmp.ne.s32.totalorder %s49, %s63
      %p65 = scmp.eq.s32.totalorder %s18, 0
      %p66 = por %p64, %p65
      %s68 = sadd.s32 %s67, 1
      %p71 = scmp.eq.s32.totalorder %s12, 1
      %p72 = scmp.ne.s32.totalorder %s67, %s69
      %p73 = scmp.eq.s32.totalorder %s12, 0
      %p74 = por %p72, %p73
      %p75 = scmp.ne.s32.totalorder %s67, %s69
      %p76 = scmp.eq.s32.totalorder %s17, 1
      %p77 = por %p75, %p76
      %p78 = scmp.ne.s32.totalorder %s69, %s70
      %p79 = scmp.eq.s32.totalorder %s17, 0
      %p80 = por %p78, %p79
      %p81 = scmp.ne.s32.totalorder %s69, %s70
      %p82 = scmp.eq.s32.totalorder %s18, 1
      %p83 = por %p81, %p82
      %p85 = scmp.ne.s32.totalorder %s70, %s84
      %p86 = scmp.eq.s32.totalorder %s18, 0
      %p87 = por %p85, %p86
      %s88 = ssub.s32 %s12, %s19
      %p89 = scmp.eq.s32.totalorder %s88, 0
      %s91 = sadd.s32 %s90, 1
      %s92 = scalar_select %p89, %s90, %s91
      %p95 = pneg %p89
      %p96 = scmp.eq.s32.totalorder %s12, 1
      %p97 = por %p95, %p96
      %p98 = scmp.ne.s32.totalorder %s90, %s93
      %p99 = scmp.eq.s32.totalorder %s12, 0
      %p100 = por %p98, %p99
      %p101 = scmp.ne.s32.totalorder %s90, %s93
      %p102 = scmp.eq.s32.totalorder %s17, 1
      %p103 = por %p101, %p102
      %p104 = scmp.ne.s32.totalorder %s93, %s94
      %p105 = scmp.eq.s32.totalorder %s17, 0
      %p106 = por %p104, %p105
      %p107 = scmp.ne.s32.totalorder %s93, %s94
      %p108 = scmp.eq.s32.totalorder %s18, 1
      %p109 = por %p107, %p108
      %p111 = scmp.ne.s32.totalorder %s94, %s110
      %p112 = scmp.eq.s32.totalorder %s18, 0
      %p113 = por %p111, %p112
      %p114 = scmp.le.s32.totalorder 1, %s12
      %p115 = scmp.lt.s32.totalorder %s12, 3
      %p116 = pnand %p114, %p115
      %p117 = pneg %p116
      // Predicated region
      $region9: #{_fwd.1} parent=5 // pred_check
        _
      $region10: #{_fwd.1} parent=5 // pred_check_branch
        %119 = sbr.rel (%p116) target = $region12
      $region11: #{_fwd.1} parent=5 // pred_region
        %s120 = ssub.s32 %s12, 1
        // Predicated region
        $region13: #{_fwd.1} parent=11 // pred_check
          %p121 = pneg %p59
        $region14: #{_fwd.1} parent=11 // pred_check_branch
          %123 = sbr.rel (%p121) target = $region16
        $region15: #{_fwd.1} parent=11 // pred_region
          _
        $region16: #{_fwd.1} parent=11 // pred_fallthru
          _
        // Predicated region
        $region17: #{_fwd.1} parent=11 // pred_check
          %p124 = pneg %p80
        $region18: #{_fwd.1} parent=11 // pred_check_branch
          %126 = sbr.rel (%p124) target = $region20
        $region19: #{_fwd.1} parent=11 // pred_region
          _
        $region20: #{_fwd.1} parent=11 // pred_fallthru
          _
      $region12: #{_fwd.1} parent=5 // pred_fallthru
        _
      %p127 = scmp.lt.s32.totalorder %s12, 2
      // Predicated region
      $region21: #{_fwd.1} parent=5 // pred_check
        %p128 = pneg %p127
      $region22: #{_fwd.1} parent=5 // pred_check_branch
        %130 = sbr.rel (%p128) target = $region24
      $region23: #{_fwd.1} parent=5 // pred_region
        // Predicated region
        $region25: #{_fwd.1} parent=23 // pred_check
          %p131 = pneg %p32
        $region26: #{_fwd.1} parent=23 // pred_check_branch
          %133 = sbr.rel (%p131) target = $region28
        $region27: #{_fwd.1} parent=23 // pred_region
          %p134 = scmp.lt.s32.totalorder %s12, 1
          %s135 = scalar_select %p134, %s12, 1
          %s136 = smul.addr %s135, 4
          %s137 = scalar_lea.vmem %s0, %s136
        $region28: #{_fwd.1} parent=23 // pred_fallthru
          _
      $region24: #{_fwd.1} parent=5 // pred_fallthru
        _
      %p138 = scmp.le.s32.totalorder 1, %s12
      %p139 = scmp.lt.s32.totalorder %s12, 3
      %p140 = pnand %p138, %p139
      %p141 = pneg %p140
      // Predicated region
      $region29: #{_fwd.1} parent=5 // pred_check
        _
      $region30: #{_fwd.1} parent=5 // pred_check_branch
        %143 = sbr.rel (%p140) target = $region32
      $region31: #{_fwd.1} parent=5 // pred_region
        %s144 = ssub.s32 %s12, 1
        %p145 = scmp.lt.s32.totalorder %s17, 1
        %s146 = scalar_select %p145, %s17, 1
        %s147 = smul.addr %s146, 4
        %s148 = scalar_lea.vmem %s0, %s147
        %p149 = pneg %p38
        %p150 = pneg %p35
        %p151 = pneg %p59
        %p152 = pneg %p56
        %p153 = pneg %p80
        %p154 = pneg %p77
        %p155 = pneg %p106
        %p156 = pneg %p103
        %s157 = sand.u32 %s93, 1
        %s158 = scalar_lea.sflag [#allocation3], %s157
        %s159 = sand.u32 %s93, 1
        %s160 = smul.addr %s159, 8
        %s161 = scalar_lea.vmem [#allocation2], %s160
        %p162 = scmp.lt.s32.totalorder %s17, 1
        %s163 = scalar_select %p162, %s17, 1
        %s164 = smul.addr %s163, 4
        %s165 = scalar_lea.vmem %s0, %s164
        %v167 = vld [vmem:[%s165] sm:$0xf]
        %v168 = vpack.c.bf16 %v167, %v167
        %v170 = vrot.slane %v168, 6
        %171 = vrot.lane.b32.xlu0 %v170, 127
        %v172 = vpop.permute.xlu0 %171
        %v173 = vrot.slane %v168, 4
        %174 = vrot.lane.b32.xlu0 %v173, 126
        %v175 = vpop.permute.xlu0 %174
        %vm176 = vcmask 1041408
        %v179 = vsel %vm176, %v168, %v172
        %vm180 = vcmask 1043456
        %v182 = vsel %vm180, %v179, %v175
        %v183 = vld [vmem:[%s1] sm:$0xf]
        %v184 = vld [vmem:[%s2] sm:$0xff]
        %186 = vset.pattern.permute.xlu0 0
        %187 = vperm.xlu0 %186, %v184
        %v188 = vpop.permute.xlu0 %187
        %vm190 = vcmask 97280
        %v192 = vsel %vm190, %v183, 0
        %vm194 = vcmask 1045504
        %v195 = vsel %vm194, %v182, 0
        %197 = vmatprep.subr.bf16.mxu0 0
        %198 = vmatpush1.bf16.msra.mxu0 %v195
        %199 = vmatprep.subr.bf16.mxu0 0
        %200 = vmatpush1.bf16.msra.mxu0 0
        %201 = vmatprep.subr.bf16.mxu0 0
        %202 = vmatpush1.bf16.msra.mxu0 0
        %203 = vmatprep.subr.bf16.mxu0 0
        %204 = vmatpush1.bf16.msra.mxu0 0
        %205 = vmatprep.subr.bf16.mxu0 0
        %206 = vmatpush1.bf16.msra.mxu0 0
        %207 = vmatprep.subr.bf16.mxu0 0
        %208 = vmatpush1.bf16.msra.mxu0 0
        %209 = vmatprep.subr.bf16.mxu0 0
        %210 = vmatpush1.bf16.msra.mxu0 0
        %211 = vmatprep.subr.bf16.mxu0 0
        %212 = vmatpush1.bf16.msra.mxu0 0
        %213 = vmatprep.subr.bf16.mxu0 0
        %214 = vmatpush1.bf16.msra.mxu0 0
        %215 = vmatprep.subr.bf16.mxu0 0
        %216 = vmatpush1.bf16.msra.mxu0 0
        %217 = vmatprep.subr.bf16.mxu0 0
        %218 = vmatpush1.bf16.msra.mxu0 0
        %219 = vmatprep.subr.bf16.mxu0 0
        %220 = vmatpush1.bf16.msra.mxu0 0
        %221 = vmatprep.subr.bf16.mxu0 0
        %222 = vmatpush1.bf16.msra.mxu0 0
        %223 = vmatprep.subr.bf16.mxu0 0
        %224 = vmatpush1.bf16.msra.mxu0 0
        %225 = vmatprep.subr.bf16.mxu0 0
        %226 = vmatpush1.bf16.msra.mxu0 0
        %227 = vmatprep.subr.bf16.mxu0 0
        %228 = vmatpush1.bf16.msra.mxu0 0
        %229 = vmatprep.mubr.bf16.mxu0 0
        %230 = vmatmul.mubr.bf16.gmra.mrb[0].mxu0 %v192
        %v231 = vpop.f32.mrb[0].mxu0
        %v232 = vadd.f32 %v188, %v231
        %v233 = vpop.f32.mrb[0].mxu0
        %v234 = vpop.f32.mrb[0].mxu0
        %v235 = vpop.f32.mrb[0].mxu0
        %236 = vdwg.mxu0
        %vm237 = vcmask 113664
        %238 = vst.msk [vmem:[%s161] sm:$0xff] %vm237, %v232
        %s239 = sand.u32 %s93, 1
        %s240 = scalar_lea.sflag [#allocation3], %s239
        %s241 = sand.u32 %s93, 1
        %s242 = smul.addr %s241, 8
        %s243 = scalar_lea.vmem [#allocation2], %s242
        // Predicated region
        $region33: #{_fwd.1} parent=31 // pred_check
          %p244 = pneg %p103
        $region34: #{_fwd.1} parent=31 // pred_check_branch
          %246 = sbr.rel (%p244) target = $region36
        $region35: #{_fwd.1} parent=31 // pred_region
          %s248 = ssub.s32 128, 128
          %249 = vsyncadd %s240, %s248
          %s250 = smul.addr %s17, 128
          %s251 = scalar_lea.hbm %s3, %s250
          %s253 = sshll.u32 %s243, 4
          %s254 = int_to_ptr.vmem [resolvable:$true] %s253
          %256 = dma.vmem_to_hbm [thread:$0]  %s254, 128, %s251, %s240
        $region36: #{_fwd.1} parent=31 // pred_fallthru
          _
      $region32: #{_fwd.1} parent=5 // pred_fallthru
        _
      %p257 = scmp.le.s32.totalorder 2, %s12
      // Predicated region
      $region37: #{_fwd.1} parent=5 // pred_check
        %p258 = pneg %p257
      $region38: #{_fwd.1} parent=5 // pred_check_branch
        %260 = sbr.rel (%p258) target = $region40
      $region39: #{_fwd.1} parent=5 // pred_region
        %s261 = ssub.s32 %s12, 2
        // Predicated region
        $region41: #{_fwd.1} parent=39 // pred_check
          %p262 = pneg %p109
        $region42: #{_fwd.1} parent=39 // pred_check_branch
          %264 = sbr.rel (%p262) target = $region44
        $region43: #{_fwd.1} parent=39 // pred_region
          %s265 = sand.u32 %s94, 1
          %s266 = scalar_lea.sflag [#allocation3], %s265
          %s267 = sand.u32 %s94, 1
          %s268 = smul.addr %s267, 8
          %s269 = scalar_lea.vmem [#allocation2], %s268
          %270 = dma.done %s266, 128
        $region44: #{_fwd.1} parent=39 // pred_fallthru
          _
      $region40: #{_fwd.1} parent=5 // pred_fallthru
        _
    $region6: #{_fwd.1} parent=1 // loop_footer
      %s16 = sadd.s32 1, %s12
    $region7: #{_fwd.1} parent=1 // loop_footer_branch
      %11 = sbr.rel target = $region3
    $region8: #{_fwd.1} parent=1 // loop_exit
      _
    %271 = vsyncpa [#allocation3], 1
    %s272 = scalar_lea.sflag [#allocation3], 1
    %273 = vsyncpa %s272, 1

</llo_original>
